<compile_context>
chip_gen: v6e
topology: v6e:2x2x1
jax: 0.10.0
libtpu: 0.0.40
codegen_flags: <defaults>
</compile_context>

<pallas_src>
import jax
import jax.numpy as jnp
from jax.experimental import pallas as pl
from jax.experimental.pallas import tpu as pltpu

_LANE = 128  # TPU vreg lane width


def _linear_sub_relu_kernel(w_ref, b_ref, x_ref, o_ref):
    """Fused Linear(2,1) -> (-1) -> ReLU, pure VPU (no MXU, no XLU).

    w_ref : SMEM (2,)   f32  -- [w00, w01] of the (1, 2) nn.Linear weight
    b_ref : SMEM (1,)   f32  -- bias - 1 (the "- other" folded in at trace time)
    x_ref : VMEM (2, TB) f32 -- features on sublanes, batch on lanes (lane-dense)
    o_ref : VMEM (1, TB) f32 -- lane-dense output tile (unmasked stores)
    """
    w0 = w_ref[0]
    w1 = w_ref[1]
    b = b_ref[0]
    # y = w0 * x[0, :] + w1 * x[1, :] + (bias - 1)  ; relu
    y = x_ref[0:1, :] * w0 + x_ref[1:2, :] * w1 + b
    o_ref[...] = jnp.maximum(y, 0.0)


def linear_sub_relu(x, weight, bias, *, tb=512):
    """relu(x @ weight.T + bias - 1).

    x      : (B, 2) f32
    weight : (1, 2) f32   (nn.Linear(2, 1) layout)
    bias   : (1,)   f32
    returns: (B, 1) f32
    """
    B, IN = x.shape
    OUT, IN2 = weight.shape
    assert IN == 2 and IN2 == 2 and OUT == 1

    # Lane-dense layout: batch on the lane axis, padded to a tile multiple.
    Bp = pl.cdiv(B, _LANE) * _LANE
    tb = min(tb, Bp)               # tile <= padded batch (stays a multiple of 128)
    Bp = pl.cdiv(Bp, tb) * tb      # padded batch is a multiple of the tile
    xt = jnp.zeros((IN, Bp), jnp.float32).at[:, :B].set(x.astype(jnp.float32).T)

    w_flat = weight.reshape(IN).astype(jnp.float32)        # (2,) -> SMEM scalars
    b_m1 = (bias.astype(jnp.float32) - 1.0).reshape(OUT)   # fold the "- 1" here

    out_t = pl.pallas_call(
        _linear_sub_relu_kernel,
        out_shape=jax.ShapeDtypeStruct((OUT, Bp), jnp.float32),
        grid=(Bp // tb,),
        in_specs=[
            pl.BlockSpec(memory_space=pltpu.MemorySpace.SMEM),  # weight scalars
            pl.BlockSpec(memory_space=pltpu.MemorySpace.SMEM),  # bias - 1
            pl.BlockSpec((IN, tb), lambda i: (0, i)),           # x tile (lane-dense)
        ],
        out_specs=pl.BlockSpec((OUT, tb), lambda i: (0, i)),
        compiler_params=pltpu.CompilerParams(
            dimension_semantics=("parallel",),                  # 2-TC shard on v7x
        ),
    )(w_flat, b_m1, xt)

    return out_t[:, :B].T  # back to (B, OUT)


def reference(x, weight, bias):
    y = x @ weight.T + bias[None, :]
    return jnp.maximum(y - 1.0, 0.0)


if __name__ == "__main__":
    key = jax.random.PRNGKey(0)
    kx, kw, kb, kx1 = jax.random.split(key, 4)

    B, IN, OUT = 1024, 2, 1  # nn.Linear(2, 1); batch exercises a multi-step grid
    x = jax.random.normal(kx, (B, IN), dtype=jnp.float32)
    weight = jax.random.normal(kw, (OUT, IN), dtype=jnp.float32)
    bias = jax.random.normal(kb, (OUT,), dtype=jnp.float32)

    out = jax.block_until_ready(linear_sub_relu(x, weight, bias))
    ref = reference(x, weight, bias)
    assert out.shape == (B, OUT)
    assert jnp.allclose(out, ref, atol=1e-5, rtol=1e-5), (out, ref)

    # Module-shaped input: x1 = torch.randn(1, 2)
    x1 = jax.random.normal(kx1, (1, IN), dtype=jnp.float32)
    out1 = jax.block_until_ready(linear_sub_relu(x1, weight, bias))
    assert jnp.allclose(out1, reference(x1, weight, bias), atol=1e-5, rtol=1e-5)

    print("KERNEL_OK")
</pallas_src>

<mosaic_0001>
module attributes {stable_mosaic.version = 11 : i64} {
  func.func @_linear_sub_relu_kernel(%arg0: i32, %arg1: memref<2xf32, #tpu.memory_space<smem>>, %arg2: memref<1xf32, #tpu.memory_space<smem>>, %arg3: memref<2x512xf32, #tpu.memory_space<vmem>>, %arg4: memref<1x512xf32, #tpu.memory_space<vmem>>) attributes {dimension_semantics = [#tpu.dimension_semantics<parallel>], iteration_bounds = array<i64: 2>, scalar_prefetch = 0 : i64, scratch_operands = 0 : i64, tpu.core_type = #tpu.core_type<tc>, window_params = [{transform_indices = @transform_0, window_bounds = array<i64: 2>}, {transform_indices = @transform_1, window_bounds = array<i64: 1>}, {transform_indices = @transform_2, window_bounds = array<i64: 2, 512>}, {transform_indices = @transform_3, window_bounds = array<i64: 1, 512>}]} {
    %c0 = arith.constant 0 : index
    %0 = memref.load %arg1[%c0] : memref<2xf32, #tpu.memory_space<smem>>
    %c1 = arith.constant 1 : index
    %1 = memref.load %arg1[%c1] : memref<2xf32, #tpu.memory_space<smem>>
    %c0_0 = arith.constant 0 : index
    %2 = memref.load %arg2[%c0_0] : memref<1xf32, #tpu.memory_space<smem>>
    %c0_1 = arith.constant 0 : index
    %c0_2 = arith.constant 0 : index
    %3 = vector.load %arg3[%c0_1, %c0_2] : memref<2x512xf32, #tpu.memory_space<vmem>>, vector<1x512xf32>
    %4 = vector.broadcast %0 : f32 to vector<1x512xf32>
    %5 = arith.mulf %3, %4 : vector<1x512xf32>
    %c1_3 = arith.constant 1 : index
    %c0_4 = arith.constant 0 : index
    %6 = vector.load %arg3[%c1_3, %c0_4] : memref<2x512xf32, #tpu.memory_space<vmem>>, vector<1x512xf32>
    %7 = vector.broadcast %1 : f32 to vector<1x512xf32>
    %8 = arith.mulf %6, %7 : vector<1x512xf32>
    %9 = arith.addf %5, %8 : vector<1x512xf32>
    %10 = vector.broadcast %2 : f32 to vector<1x512xf32>
    %11 = arith.addf %9, %10 : vector<1x512xf32>
    %cst = arith.constant 0.000000e+00 : f32
    %12 = vector.broadcast %cst : f32 to vector<1x512xf32>
    %13 = arith.maximumf %11, %12 : vector<1x512xf32>
    %c0_5 = arith.constant 0 : index
    %c0_6 = arith.constant 0 : index
    %14 = vector.load %arg4[%c0_5, %c0_6] : memref<1x512xf32, #tpu.memory_space<vmem>>, vector<1x512xf32>
    tpu.vector_store %arg4[%c0_5, %c0_6], %13 {strides = array<i32>} : memref<1x512xf32, #tpu.memory_space<vmem>>, vector<1x512xf32>,
    return
  }
  func.func @transform_0(%arg0: i32) -> i32 {
    %c0_i32 = arith.constant 0 : i32
    %c0_i32_0 = arith.constant 0 : i32
    return %c0_i32 : i32
  }
  func.func @transform_1(%arg0: i32) -> i32 {
    %c0_i32 = arith.constant 0 : i32
    %c0_i32_0 = arith.constant 0 : i32
    return %c0_i32 : i32
  }
  func.func @transform_2(%arg0: i32) -> (i32, i32) {
    %c0_i32 = arith.constant 0 : i32
    %c0_i32_0 = arith.constant 0 : i32
    return %c0_i32, %arg0 : i32, i32
  }
  func.func @transform_3(%arg0: i32) -> (i32, i32) {
    %c0_i32 = arith.constant 0 : i32
    %c0_i32_0 = arith.constant 0 : i32
    return %c0_i32, %arg0 : i32, i32
  }
}

</mosaic_0001>

<llo_original>
// kernel: tpu_custom_call.1
$region0: #{tpu_custom_call.1}
  #allocation0 [shape = 'u32[]', space=smem, size = 0x4, offset = 0x4, fixed_abs, tag = 'smem constant byte address 0x4 - core index']
  #allocation1 [shape = 'u32[144,128]{1,0:T(1,128)}', space=vmem, size = 0x12000, scoped, tag = 'internal scratch']
  #allocation2 [shape = 'f32[1]{0:T(128)S(6)}', space=smem, size = 0x200, scoped, tag = 'scoped memory for tpu_custom_call.1']
  %s0 = inlined_call_operand.vmem [shape: f32[2], index: 0, kind: input, shape index: {}]
  %s1 = inlined_call_operand.<no memory space> [shape: f32[1], index: 1, kind: input, shape index: {}]
  %s2 = inlined_call_operand.hbm [shape: f32[2,1024], index: 2, kind: input, shape index: {}]
  %s3 = inlined_call_operand.hbm [shape: f32[1,1024], index: 3, kind: output, shape index: {}]
  %s4 = sld [smem:[#allocation0]]
  $region53: #{tpu_custom_call.1} parent=0
    _
  %s6 = ssub.s32 1, %s4
  %s7 = scalar_select 0, %s6, %s4
  %8 = sst [smem:[#allocation2]] %s1
  $region1: #{tpu_custom_call.1} parent=0
    #allocation3 [shape = 'u8[512]{0}', space=smem, size = 0x200, scoped, tag = 'input window, operand 0, single buffered']
    #allocation4 [shape = 's32[2]{0}', space=sflag, size = 0x8, scoped, tag = 'scoped memory for tpu_custom_call.1']
    #allocation5 [shape = 's32[2]{0}', space=sflag, size = 0x8, scoped, tag = 'scoped memory for tpu_custom_call.1']
    #allocation6 [shape = 's32[2]{0}', space=sflag, size = 0x8, scoped, tag = 'scoped memory for tpu_custom_call.1']
    #allocation7 [shape = 'u8[8192]{0}', space=vmem, size = 0x2000, scoped, tag = 'input window, operand 2']
    #allocation8 [shape = 'u8[4096]{0}', space=vmem, size = 0x1000, scoped, tag = 'output window, operand 0']
    %9 = vsyncpa [#allocation6], 0
    %10 = vsyncpa [#allocation4], 0
    %s11 = scalar_lea.sflag [#allocation4], 1
    %12 = vsyncpa %s11, 0
    %13 = vsyncpa [#allocation5], 0
    %s14 = scalar_lea.sflag [#allocation5], 1
    %15 = vsyncpa %s14, 0
    loop: start=0, step=1, limit=4
    $region2: #{tpu_custom_call.1} parent=1 // loop_pre_header
      _
    $region3: #{tpu_custom_call.1} parent=1 // loop_header
      %s17 = sphi 0, %s21
      %p18 = scmp.ge.s32.totalorder %s17, 4
      %s25 = sphi 0, %s25
      %s27 = sphi 0, %s25
      %s28 = sphi 0, %s27
      %s42 = sphi 0, %s28
      %s46 = sphi 0, %s46
      %s48 = sphi 0, %s46
      %s49 = sphi 0, %s48
      %s63 = sphi 0, %s49
      %s69 = sphi 0, %s71
      %s72 = sphi 0, %s69
      %s73 = sphi 0, %s72
      %s89 = sphi 0, %s73
      %s95 = sphi 0, %s97
      %s98 = sphi 0, %s95
      %s99 = sphi 0, %s98
      %s115 = sphi 0, %s99
    $region4: #{tpu_custom_call.1} parent=1 // loop_header_branch
      %20 = sbr.rel (%p18) target = $region8
    $region5: #{tpu_custom_call.1} parent=1 // loop_body
      %s22 = ssub.s32 %s17, 1
      %s23 = ssub.s32 %s17, 2
      %s24 = sadd.s32 %s17, 1
      %s26 = sadd.s32 %s25, 1
      %p29 = scmp.eq.s32.totalorder %s17, 1
      %p30 = scmp.ne.s32.totalorder %s25, %s27
      %p31 = scmp.eq.s32.totalorder %s17, 0
      %p32 = por %p30, %p31
      %p33 = scmp.ne.s32.totalorder %s25, %s27
      %p34 = scmp.eq.s32.totalorder %s22, 1
      %p35 = por %p33, %p34
      %p36 = scmp.ne.s32.totalorder %s27, %s28
      %p37 = scmp.eq.s32.totalorder %s22, 0
      %p38 = por %p36, %p37
      %p39 = scmp.ne.s32.totalorder %s27, %s28
      %p40 = scmp.eq.s32.totalorder %s23, 1
      %p41 = por %p39, %p40
      %p43 = scmp.ne.s32.totalorder %s28, %s42
      %p44 = scmp.eq.s32.totalorder %s23, 0
      %p45 = por %p43, %p44
      %s47 = sadd.s32 %s46, 1
      %p50 = scmp.eq.s32.totalorder %s17, 1
      %p51 = scmp.ne.s32.totalorder %s46, %s48
      %p52 = scmp.eq.s32.totalorder %s17, 0
      %p53 = por %p51, %p52
      %p54 = scmp.ne.s32.totalorder %s46, %s48
      %p55 = scmp.eq.s32.totalorder %s22, 1
      %p56 = por %p54, %p55
      %p57 = scmp.ne.s32.totalorder %s48, %s49
      %p58 = scmp.eq.s32.totalorder %s22, 0
      %p59 = por %p57, %p58
      %p60 = scmp.ne.s32.totalorder %s48, %s49
      %p61 = scmp.eq.s32.totalorder %s23, 1
      %p62 = por %p60, %p61
      %p64 = scmp.ne.s32.totalorder %s49, %s63
      %p65 = scmp.eq.s32.totalorder %s23, 0
      %p66 = por %p64, %p65
      %s67 = ssub.s32 %s17, %s24
      %p68 = scmp.eq.s32.totalorder %s67, 0
      %s70 = sadd.s32 %s69, 1
      %s71 = scalar_select %p68, %s69, %s70
      %p74 = pneg %p68
      %p75 = scmp.eq.s32.totalorder %s17, 1
      %p76 = por %p74, %p75
      %p77 = scmp.ne.s32.totalorder %s69, %s72
      %p78 = scmp.eq.s32.totalorder %s17, 0
      %p79 = por %p77, %p78
      %p80 = scmp.ne.s32.totalorder %s69, %s72
      %p81 = scmp.eq.s32.totalorder %s22, 1
      %p82 = por %p80, %p81
      %p83 = scmp.ne.s32.totalorder %s72, %s73
      %p84 = scmp.eq.s32.totalorder %s22, 0
      %p85 = por %p83, %p84
      %p86 = scmp.ne.s32.totalorder %s72, %s73
      %p87 = scmp.eq.s32.totalorder %s23, 1
      %p88 = por %p86, %p87
      %p90 = scmp.ne.s32.totalorder %s73, %s89
      %p91 = scmp.eq.s32.totalorder %s23, 0
      %p92 = por %p90, %p91
      %s93 = ssub.s32 %s17, %s24
      %p94 = scmp.eq.s32.totalorder %s93, 0
      %s96 = sadd.s32 %s95, 1
      %s97 = scalar_select %p94, %s95, %s96
      %p100 = pneg %p94
      %p101 = scmp.eq.s32.totalorder %s17, 1
      %p102 = por %p100, %p101
      %p103 = scmp.ne.s32.totalorder %s95, %s98
      %p104 = scmp.eq.s32.totalorder %s17, 0
      %p105 = por %p103, %p104
      %p106 = scmp.ne.s32.totalorder %s95, %s98
      %p107 = scmp.eq.s32.totalorder %s22, 1
      %p108 = por %p106, %p107
      %p109 = scmp.ne.s32.totalorder %s98, %s99
      %p110 = scmp.eq.s32.totalorder %s22, 0
      %p111 = por %p109, %p110
      %p112 = scmp.ne.s32.totalorder %s98, %s99
      %p113 = scmp.eq.s32.totalorder %s23, 1
      %p114 = por %p112, %p113
      %p116 = scmp.ne.s32.totalorder %s99, %s115
      %p117 = scmp.eq.s32.totalorder %s23, 0
      %p118 = por %p116, %p117
      %p119 = scmp.le.s32.totalorder 1, %s17
      %p120 = scmp.lt.s32.totalorder %s17, 3
      %p121 = pnand %p119, %p120
      %p122 = pneg %p121
      // Predicated region
      $region9: #{tpu_custom_call.1} parent=5 // pred_check
        _
      $region10: #{tpu_custom_call.1} parent=5 // pred_check_branch
        %124 = sbr.rel (%p121) target = $region12
      $region11: #{tpu_custom_call.1} parent=5 // pred_region
        %s125 = ssub.s32 %s17, 1
        // Predicated region
        $region13: #{tpu_custom_call.1} parent=11 // pred_check
          %p126 = pneg %p38
        $region14: #{tpu_custom_call.1} parent=11 // pred_check_branch
          %128 = sbr.rel (%p126) target = $region16
        $region15: #{tpu_custom_call.1} parent=11 // pred_region
          %s130 = ssub.s32 16, 16
          %131 = vsyncadd [#allocation6], %s130
          %s133 = sshll.u32 %s0, 4
          %s134 = int_to_ptr.vmem [resolvable:$true] %s133
          %136 = dma.vmem_to_smem %s134, 16, [#allocation3], [#allocation6]
        $region16: #{tpu_custom_call.1} parent=11 // pred_fallthru
          _
        // Predicated region
        $region17: #{tpu_custom_call.1} parent=11 // pred_check
          %p137 = pneg %p59
        $region18: #{tpu_custom_call.1} parent=11 // pred_check_branch
          %139 = sbr.rel (%p137) target = $region20
        $region19: #{tpu_custom_call.1} parent=11 // pred_region
          _
        $region20: #{tpu_custom_call.1} parent=11 // pred_fallthru
          _
      $region12: #{tpu_custom_call.1} parent=5 // pred_fallthru
        _
      %p140 = scmp.lt.s32.totalorder %s17, 2
      // Predicated region
      $region21: #{tpu_custom_call.1} parent=5 // pred_check
        %p141 = pneg %p140
      $region22: #{tpu_custom_call.1} parent=5 // pred_check_branch
        %143 = sbr.rel (%p141) target = $region24
      $region23: #{tpu_custom_call.1} parent=5 // pred_region
        // Predicated region
        $region25: #{tpu_custom_call.1} parent=23 // pred_check
          %p144 = pneg %p79
        $region26: #{tpu_custom_call.1} parent=23 // pred_check_branch
          %146 = sbr.rel (%p144) target = $region28
        $region27: #{tpu_custom_call.1} parent=23 // pred_region
          %s147 = sand.u32 %s69, 1
          %s148 = scalar_lea.sflag [#allocation4], %s147
          %s149 = sand.u32 %s69, 1
          %s150 = smul.addr %s149, 8
          %s151 = scalar_lea.vmem [#allocation7], %s150
          %s152 = smul.u32 4, %s17
          %s154 = ssub.s32 128, 128
          %155 = vsyncadd %s148, %s154
          %s156 = smul.addr %s152, 32
          %s157 = scalar_lea.hbm %s2, %s156
          %s159 = sshll.u32 %s151, 4
          %s160 = int_to_ptr.vmem [resolvable:$true] %s159
          %162 = dma.hbm_to_vmem [thread:$0]  %s157, 128, %s160, %s148
        $region28: #{tpu_custom_call.1} parent=23 // pred_fallthru
          _
      $region24: #{tpu_custom_call.1} parent=5 // pred_fallthru
        _
      %p163 = scmp.le.s32.totalorder 1, %s17
      %p164 = scmp.lt.s32.totalorder %s17, 3
      %p165 = pnand %p163, %p164
      %p166 = pneg %p165
      // Predicated region
      $region29: #{tpu_custom_call.1} parent=5 // pred_check
        _
      $region30: #{tpu_custom_call.1} parent=5 // pred_check_branch
        %168 = sbr.rel (%p165) target = $region32
      $region31: #{tpu_custom_call.1} parent=5 // pred_region
        %s169 = ssub.s32 %s17, 1
        // Predicated region
        $region33: #{tpu_custom_call.1} parent=31 // pred_check
          %p170 = pneg %p38
        $region34: #{tpu_custom_call.1} parent=31 // pred_check_branch
          %172 = sbr.rel (%p170) target = $region36
        $region35: #{tpu_custom_call.1} parent=31 // pred_region
          %173 = dma.done [#allocation6], 16
        $region36: #{tpu_custom_call.1} parent=31 // pred_fallthru
          _
        %s174 = sand.u32 %s72, 1
        %s175 = scalar_lea.sflag [#allocation4], %s174
        %s176 = sand.u32 %s72, 1
        %s177 = smul.addr %s176, 8
        %s178 = scalar_lea.vmem [#allocation7], %s177
        // Predicated region
        $region37: #{tpu_custom_call.1} parent=31 // pred_check
          %p179 = pneg %p85
        $region38: #{tpu_custom_call.1} parent=31 // pred_check_branch
          %181 = sbr.rel (%p179) target = $region40
        $region39: #{tpu_custom_call.1} parent=31 // pred_region
          %182 = dma.done %s175, 128
        $region40: #{tpu_custom_call.1} parent=31 // pred_fallthru
          _
        %183 = sfence
        %p184 = pneg %p38
        %p185 = pneg %p35
        %p186 = pneg %p59
        %p187 = pneg %p56
        %s188 = sand.u32 %s72, 1
        %s189 = scalar_lea.sflag [#allocation4], %s188
        %s190 = sand.u32 %s72, 1
        %s191 = smul.addr %s190, 8
        %s192 = scalar_lea.vmem [#allocation7], %s191
        %p193 = pneg %p85
        %p194 = pneg %p82
        %p195 = pneg %p111
        %p196 = pneg %p108
        %s197 = sand.u32 %s98, 1
        %s198 = scalar_lea.sflag [#allocation5], %s197
        %s199 = sand.u32 %s98, 1
        %s200 = smul.addr %s199, 4
        %s201 = scalar_lea.vmem [#allocation8], %s200
        %s202 = smul.u32 4, %s22
        %s203 = smul.u32 4, %s22
        %s204 = sld [smem:[#allocation3]]
        %s205 = sld [smem:[#allocation3 + $0x1]]
        %s206 = sld [smem:[#allocation2]]
        %v207 = vld [vmem:[%s178] ss:$2 sm:$0xf]
        %v208 = vstv %s204
        %v209 = vmul.f32 %v207, %v208
        %s210 = scalar_lea.vmem %s178, 1 [#allocation7]
        %v211 = vld [vmem:[%s210] ss:$2 sm:$0xf]
        %v212 = vstv %s205
        %v213 = vmul.f32 %v211, %v212
        %v214 = vadd.f32 %v209, %v213
        %v215 = vstv %s206
        %v216 = vadd.f32 %v214, %v215
        %v217 = vmax.f32 %v216, 0.0
        %v218 = vlaneseq
        %vm219 = vcmp.ge.s32.totalorder %v218, 0
        %vm220 = vcmp.lt.s32.totalorder %v218, 512
        %vm221 = vmand %vm219, %vm220
        %222 = vst.msk [vmem:[%s201] sm:$0xf] %vm221, %v217
        %s223 = sand.u32 %s98, 1
        %s224 = scalar_lea.sflag [#allocation5], %s223
        %s225 = sand.u32 %s98, 1
        %s226 = smul.addr %s225, 4
        %s227 = scalar_lea.vmem [#allocation8], %s226
        // Predicated region
        $region41: #{tpu_custom_call.1} parent=31 // pred_check
          %p228 = pneg %p108
        $region42: #{tpu_custom_call.1} parent=31 // pred_check_branch
          %230 = sbr.rel (%p228) target = $region44
        $region43: #{tpu_custom_call.1} parent=31 // pred_region
          %s231 = smul.u32 4, %s22
          %s233 = ssub.s32 64, 64
          %234 = vsyncadd %s224, %s233
          %s235 = smul.addr %s231, 16
          %s236 = scalar_lea.hbm %s3, %s235
          %s238 = sshll.u32 %s227, 4
          %s239 = int_to_ptr.vmem [resolvable:$true] %s238
          %241 = dma.vmem_to_hbm [thread:$0]  %s239, 64, %s236, %s224
        $region44: #{tpu_custom_call.1} parent=31 // pred_fallthru
          _
      $region32: #{tpu_custom_call.1} parent=5 // pred_fallthru
        _
      %p242 = scmp.le.s32.totalorder 2, %s17
      // Predicated region
      $region45: #{tpu_custom_call.1} parent=5 // pred_check
        %p243 = pneg %p242
      $region46: #{tpu_custom_call.1} parent=5 // pred_check_branch
        %245 = sbr.rel (%p243) target = $region48
      $region47: #{tpu_custom_call.1} parent=5 // pred_region
        %s246 = ssub.s32 %s17, 2
        // Predicated region
        $region49: #{tpu_custom_call.1} parent=47 // pred_check
          %p247 = pneg %p114
        $region50: #{tpu_custom_call.1} parent=47 // pred_check_branch
          %249 = sbr.rel (%p247) target = $region52
        $region51: #{tpu_custom_call.1} parent=47 // pred_region
          %s250 = sand.u32 %s99, 1
          %s251 = scalar_lea.sflag [#allocation5], %s250
          %s252 = sand.u32 %s99, 1
          %s253 = smul.addr %s252, 4
          %s254 = scalar_lea.vmem [#allocation8], %s253
          %255 = dma.done %s251, 64
        $region52: #{tpu_custom_call.1} parent=47 // pred_fallthru
          _
      $region48: #{tpu_custom_call.1} parent=5 // pred_fallthru
        _
    $region6: #{tpu_custom_call.1} parent=1 // loop_footer
      %s21 = sadd.s32 1, %s17
    $region7: #{tpu_custom_call.1} parent=1 // loop_footer_branch
      %16 = sbr.rel target = $region3
    $region8: #{tpu_custom_call.1} parent=1 // loop_exit
      _
    %256 = vsyncpa [#allocation4], 1
    %s257 = scalar_lea.sflag [#allocation4], 1
    %258 = vsyncpa %s257, 1
    %259 = vsyncpa [#allocation5], 1
    %s260 = scalar_lea.sflag [#allocation5], 1
    %261 = vsyncpa %s260, 1
    %262 = vsyncpa [#allocation6], 1
    %s263 = scalar_lea.sflag [#allocation6], 1
    %264 = vsyncpa %s263, 1

</llo_original>
